<compile_context>
chip_gen: v6e
topology: v6e:2x2x1
jax: 0.10.0
libtpu: 0.0.40
codegen_flags: <defaults>
</compile_context>

<pallas_src>
import jax
import jax.numpy as jnp
from jax.experimental import pallas as pl
from jax.experimental.pallas import tpu as pltpu

K_UP = 3
K_DOWN = 6
PAD = K_DOWN - 1      # causal halo = max kernel size - 1


def _causal_block_kernel(x_ref, xprev_ref, w_ref, b_ref, out_ref):
    """One (batch, time-tile) grid step.

    x_ref     : (1, C_in, TILE_T)   current time tile (NCT, time on lanes)
    xprev_ref : (1, C_in, TILE_T)   previous time tile (== current at t == 0)
    w_ref     : (6, C_all, C_in)    fused conv taps, C_all = 2 * filters
    b_ref     : (C_all, 1)          fused bias
    out_ref   : (1, filters, TILE_T)
    """
    tile_t = x_ref.shape[2]
    c_all = w_ref.shape[1]
    filters = out_ref.shape[1]

    x_cur = x_ref[0]                                      # (C_in, TILE_T)

    # Causal halo: last PAD samples of the previous tile, zeroed on tile 0.
    not_first = (pl.program_id(1) > 0).astype(x_cur.dtype)
    halo = xprev_ref[0][:, tile_t - PAD:] * not_first     # (C_in, PAD)
    xw = jnp.concatenate([halo, x_cur], axis=-1)          # (C_in, TILE_T + PAD)

    # Six fused taps: acc[o, t] = sum_k sum_i W[k, o, i] * x[i, t - 5 + k].
    acc = jnp.zeros((c_all, tile_t), jnp.float32)
    for k in range(K_DOWN):                               # static, unrolled
        acc = acc + jnp.dot(w_ref[k], xw[:, k:k + tile_t],
                            preferred_element_type=jnp.float32)
    acc = acc + b_ref[...]                                # broadcast over lanes

    # Channel order of acc = [sig_up, sig_down, tanh_up, tanh_down], so the
    # gated result is already [up, down]: one lane-dense store, no concat.
    gated = jax.nn.sigmoid(acc[:filters]) * jnp.tanh(acc[filters:])
    out_ref[0] = gated.astype(out_ref.dtype)


def _pick_tile_t(T):
    for cand in (1024, 512, 256, 128):
        if T % cand == 0:
            return cand
    return T          # fall back to a single time tile


def causal_block_pallas(x_nct, w_all, b_all, *, tile_t=None):
    """x_nct: (N, C_in, T) f32 -> (N, filters, T) f32 (PyTorch NCT layout).

    w_all: (6, 2*filters, C_in) fused taps, b_all: (2*filters, 1) fused bias.
    """
    N, C_in, T = x_nct.shape
    K, c_all, _ = w_all.shape
    assert K == K_DOWN and c_all % 2 == 0
    filters = c_all // 2

    if tile_t is None:
        tile_t = _pick_tile_t(T)
    assert T % tile_t == 0 and (tile_t % 128 == 0 or tile_t == T)
    num_t = T // tile_t

    return pl.pallas_call(
        _causal_block_kernel,
        out_shape=jax.ShapeDtypeStruct((N, filters, T), jnp.float32),
        grid=(N, num_t),
        in_specs=[
            # current time tile
            pl.BlockSpec((1, C_in, tile_t), lambda n, t: (n, 0, t)),
            # previous time tile (halo source); clamped to 0 on the first tile
            pl.BlockSpec((1, C_in, tile_t),
                         lambda n, t: (n, 0, jnp.maximum(t - 1, 0))),
            # fused weights / bias: constant index_map -> stay VMEM-resident
            pl.BlockSpec((K_DOWN, c_all, C_in), lambda n, t: (0, 0, 0)),
            pl.BlockSpec((c_all, 1), lambda n, t: (0, 0)),
        ],
        out_specs=pl.BlockSpec((1, filters, tile_t), lambda n, t: (n, 0, t)),
        compiler_params=pltpu.CompilerParams(
            dimension_semantics=("parallel", "parallel"),
            vmem_limit_bytes=32 * 1024 * 1024),
    )(x_nct, x_nct, w_all, b_all)


def init_params(key, in_channels, filters):
    """PyTorch Conv1d-style params: four (w: (c_half, C_in, K), b: (c_half,))
    pairs in order (sig_up K3, tanh_up K3, sig_down K6, tanh_down K6),
    uniform +/- 1/sqrt(fan_in) like torch defaults."""
    c_half = filters // 2
    ws, bs = [], []
    for ksize in (K_UP, K_UP, K_DOWN, K_DOWN):
        key, kw, kb = jax.random.split(key, 3)
        bound = 1.0 / (in_channels * ksize) ** 0.5
        ws.append(jax.random.uniform(kw, (c_half, in_channels, ksize),
                                     jnp.float32, -bound, bound))
        bs.append(jax.random.uniform(kb, (c_half,), jnp.float32, -bound, bound))
    return ws, bs


def pack_params(ws, bs):
    """Fuse the four convs into one 6-tap weight tensor + one bias column.

    Output-channel order is [sig_up, sig_down, tanh_up, tanh_down]; the K=3
    kernels are zero-padded on the left to 6 taps so every branch shares the
    same 6-sample causal window.  Returns (6, 4*c_half, C_in), (4*c_half, 1).
    """
    w_su, w_tu, w_sd, w_td = ws
    b_su, b_tu, b_sd, b_td = bs

    def taps6(w):                          # (c_half, C_in, K) -> (6, c_half, C_in)
        k = w.shape[-1]
        w6 = jnp.pad(w, ((0, 0), (0, 0), (K_DOWN - k, 0)))
        return jnp.transpose(w6, (2, 0, 1))

    w_all = jnp.concatenate(
        [taps6(w_su), taps6(w_sd), taps6(w_tu), taps6(w_td)], axis=1)
    b_all = jnp.concatenate([b_su, b_sd, b_tu, b_td])[:, None]
    return w_all, b_all


def causal_block_reference(x_nct, ws, bs):
    """Pure-JAX reference (lax.conv, HIGHEST precision) for validation."""
    w_su, w_tu, w_sd, w_td = ws
    b_su, b_tu, b_sd, b_td = bs

    def cconv(x, w, b):
        k = w.shape[-1]
        y = jax.lax.conv_general_dilated(
            x, w, window_strides=(1,), padding=[(k - 1, 0)],
            dimension_numbers=("NCH", "OIH", "NCH"),
            precision=jax.lax.Precision.HIGHEST)
        return y + b[None, :, None]

    up = jax.nn.sigmoid(cconv(x_nct, w_su, b_su)) * jnp.tanh(cconv(x_nct, w_tu, b_tu))
    down = jax.nn.sigmoid(cconv(x_nct, w_sd, b_sd)) * jnp.tanh(cconv(x_nct, w_td, b_td))
    return jnp.concatenate([up, down], axis=1)


if __name__ == "__main__":
    FILTERS = 16

    key = jax.random.PRNGKey(0)
    key, kp = jax.random.split(key)
    ws, bs = init_params(kp, 4, FILTERS)
    w_all, b_all = pack_params(ws, bs)

    # Case 1: small shape from the module spec (single time tile).
    key, kx = jax.random.split(key)
    x_small = jax.random.normal(kx, (2, 4, 16), jnp.float32)
    out_small = jax.block_until_ready(causal_block_pallas(x_small, w_all, b_all))
    ref_small = causal_block_reference(x_small, ws, bs)
    assert out_small.shape == (2, FILTERS, 16), out_small.shape
    assert jnp.allclose(out_small, ref_small, atol=2e-4, rtol=2e-4), \
        float(jnp.max(jnp.abs(out_small - ref_small)))

    # Case 2: longer sequence, forced multi-tile -> exercises the causal halo
    # carried across time tiles.
    key, kx = jax.random.split(key)
    x_long = jax.random.normal(kx, (2, 4, 256), jnp.float32)
    out_long = jax.block_until_ready(
        causal_block_pallas(x_long, w_all, b_all, tile_t=128))
    ref_long = causal_block_reference(x_long, ws, bs)
    assert out_long.shape == (2, FILTERS, 256), out_long.shape
    assert jnp.allclose(out_long, ref_long, atol=2e-4, rtol=2e-4), \
        float(jnp.max(jnp.abs(out_long - ref_long)))

    print("KERNEL_OK")
</pallas_src>

<mosaic_0001>
module attributes {stable_mosaic.version = 11 : i64} {
  func.func @_causal_block_kernel(%arg0: i32, %arg1: i32, %arg2: memref<1x4x16xf32, #tpu.memory_space<vmem>>, %arg3: memref<1x4x16xf32, #tpu.memory_space<vmem>>, %arg4: memref<6x32x4xf32, #tpu.memory_space<vmem>>, %arg5: memref<32x1xf32, #tpu.memory_space<vmem>>, %arg6: memref<1x16x16xf32, #tpu.memory_space<vmem>>) attributes {dimension_semantics = [#tpu.dimension_semantics<parallel>, #tpu.dimension_semantics<parallel>], iteration_bounds = array<i64: 2, 1>, scalar_prefetch = 0 : i64, scratch_operands = 0 : i64, tpu.core_type = #tpu.core_type<tc>, window_params = [{transform_indices = @transform_0, window_bounds = array<i64: 1, 4, 16>}, {transform_indices = @transform_1, window_bounds = array<i64: 1, 4, 16>}, {pipeline_mode = #tpu.pipeline_mode<synchronous>, transform_indices = @transform_2, window_bounds = array<i64: 6, 32, 4>}, {pipeline_mode = #tpu.pipeline_mode<synchronous>, transform_indices = @transform_3, window_bounds = array<i64: 32, 1>}, {transform_indices = @transform_4, window_bounds = array<i64: 1, 16, 16>}]} {
    %c0 = arith.constant 0 : index
    %c0_0 = arith.constant 0 : index
    %c0_1 = arith.constant 0 : index
    %0 = vector.load %arg2[%c0, %c0_0, %c0_1] : memref<1x4x16xf32, #tpu.memory_space<vmem>>, vector<1x4x16xf32>
    %1 = vector.shape_cast %0 : vector<1x4x16xf32> to vector<4x16xf32>
    %c0_i32 = arith.constant 0 : i32
    %2 = arith.cmpi sgt, %arg1, %c0_i32 : i32
    %3 = arith.extui %2 : i1 to i32
    %4 = arith.sitofp %3 : i32 to f32
    %c0_2 = arith.constant 0 : index
    %c0_3 = arith.constant 0 : index
    %c0_4 = arith.constant 0 : index
    %5 = vector.load %arg3[%c0_2, %c0_3, %c0_4] : memref<1x4x16xf32, #tpu.memory_space<vmem>>, vector<1x4x16xf32>
    %6 = vector.shape_cast %5 : vector<1x4x16xf32> to vector<4x16xf32>
    %7 = vector.extract_strided_slice %6 {offsets = [0, 11], sizes = [4, 5], strides = [1, 1]} : vector<4x16xf32> to vector<4x5xf32>
    %8 = vector.broadcast %4 : f32 to vector<4x5xf32>
    %9 = arith.mulf %7, %8 : vector<4x5xf32>
    %10 = tpu.concatenate %9, %1 in 1 : vector<4x5xf32>, vector<4x16xf32> -> vector<4x21xf32>
    %cst = arith.constant 0.000000e+00 : f32
    %11 = vector.broadcast %cst : f32 to vector<32x16xf32>
    %c0_5 = arith.constant 0 : index
    %c0_6 = arith.constant 0 : index
    %c0_7 = arith.constant 0 : index
    %12 = vector.load %arg4[%c0_5, %c0_6, %c0_7] : memref<6x32x4xf32, #tpu.memory_space<vmem>>, vector<1x32x4xf32>
    %13 = vector.shape_cast %12 : vector<1x32x4xf32> to vector<32x4xf32>
    %14 = vector.extract_strided_slice %10 {offsets = [0, 0], sizes = [4, 16], strides = [1, 1]} : vector<4x21xf32> to vector<4x16xf32>
    %cst_8 = arith.constant dense<0.000000e+00> : vector<32x16xf32>
    %15 = tpu.matmul %13, %14, %cst_8 {dimension_numbers = #tpu.dot_dimension_numbers<[1], [0], [0], [1], [0, 0, 1, 1], [], []>} : vector<32x4xf32>, vector<4x16xf32>, vector<32x16xf32> -> vector<32x16xf32>
    %16 = arith.addf %11, %15 : vector<32x16xf32>
    %c1 = arith.constant 1 : index
    %c0_9 = arith.constant 0 : index
    %c0_10 = arith.constant 0 : index
    %17 = vector.load %arg4[%c1, %c0_9, %c0_10] : memref<6x32x4xf32, #tpu.memory_space<vmem>>, vector<1x32x4xf32>
    %18 = vector.shape_cast %17 : vector<1x32x4xf32> to vector<32x4xf32>
    %19 = vector.extract_strided_slice %10 {offsets = [0, 1], sizes = [4, 16], strides = [1, 1]} : vector<4x21xf32> to vector<4x16xf32>
    %cst_11 = arith.constant dense<0.000000e+00> : vector<32x16xf32>
    %20 = tpu.matmul %18, %19, %cst_11 {dimension_numbers = #tpu.dot_dimension_numbers<[1], [0], [0], [1], [0, 0, 1, 1], [], []>} : vector<32x4xf32>, vector<4x16xf32>, vector<32x16xf32> -> vector<32x16xf32>
    %21 = arith.addf %16, %20 : vector<32x16xf32>
    %c2 = arith.constant 2 : index
    %c0_12 = arith.constant 0 : index
    %c0_13 = arith.constant 0 : index
    %22 = vector.load %arg4[%c2, %c0_12, %c0_13] : memref<6x32x4xf32, #tpu.memory_space<vmem>>, vector<1x32x4xf32>
    %23 = vector.shape_cast %22 : vector<1x32x4xf32> to vector<32x4xf32>
    %24 = vector.extract_strided_slice %10 {offsets = [0, 2], sizes = [4, 16], strides = [1, 1]} : vector<4x21xf32> to vector<4x16xf32>
    %cst_14 = arith.constant dense<0.000000e+00> : vector<32x16xf32>
    %25 = tpu.matmul %23, %24, %cst_14 {dimension_numbers = #tpu.dot_dimension_numbers<[1], [0], [0], [1], [0, 0, 1, 1], [], []>} : vector<32x4xf32>, vector<4x16xf32>, vector<32x16xf32> -> vector<32x16xf32>
    %26 = arith.addf %21, %25 : vector<32x16xf32>
    %c3 = arith.constant 3 : index
    %c0_15 = arith.constant 0 : index
    %c0_16 = arith.constant 0 : index
    %27 = vector.load %arg4[%c3, %c0_15, %c0_16] : memref<6x32x4xf32, #tpu.memory_space<vmem>>, vector<1x32x4xf32>
    %28 = vector.shape_cast %27 : vector<1x32x4xf32> to vector<32x4xf32>
    %29 = vector.extract_strided_slice %10 {offsets = [0, 3], sizes = [4, 16], strides = [1, 1]} : vector<4x21xf32> to vector<4x16xf32>
    %cst_17 = arith.constant dense<0.000000e+00> : vector<32x16xf32>
    %30 = tpu.matmul %28, %29, %cst_17 {dimension_numbers = #tpu.dot_dimension_numbers<[1], [0], [0], [1], [0, 0, 1, 1], [], []>} : vector<32x4xf32>, vector<4x16xf32>, vector<32x16xf32> -> vector<32x16xf32>
    %31 = arith.addf %26, %30 : vector<32x16xf32>
    %c4 = arith.constant 4 : index
    %c0_18 = arith.constant 0 : index
    %c0_19 = arith.constant 0 : index
    %32 = vector.load %arg4[%c4, %c0_18, %c0_19] : memref<6x32x4xf32, #tpu.memory_space<vmem>>, vector<1x32x4xf32>
    %33 = vector.shape_cast %32 : vector<1x32x4xf32> to vector<32x4xf32>
    %34 = vector.extract_strided_slice %10 {offsets = [0, 4], sizes = [4, 16], strides = [1, 1]} : vector<4x21xf32> to vector<4x16xf32>
    %cst_20 = arith.constant dense<0.000000e+00> : vector<32x16xf32>
    %35 = tpu.matmul %33, %34, %cst_20 {dimension_numbers = #tpu.dot_dimension_numbers<[1], [0], [0], [1], [0, 0, 1, 1], [], []>} : vector<32x4xf32>, vector<4x16xf32>, vector<32x16xf32> -> vector<32x16xf32>
    %36 = arith.addf %31, %35 : vector<32x16xf32>
    %c5 = arith.constant 5 : index
    %c0_21 = arith.constant 0 : index
    %c0_22 = arith.constant 0 : index
    %37 = vector.load %arg4[%c5, %c0_21, %c0_22] : memref<6x32x4xf32, #tpu.memory_space<vmem>>, vector<1x32x4xf32>
    %38 = vector.shape_cast %37 : vector<1x32x4xf32> to vector<32x4xf32>
    %39 = vector.extract_strided_slice %10 {offsets = [0, 5], sizes = [4, 16], strides = [1, 1]} : vector<4x21xf32> to vector<4x16xf32>
    %cst_23 = arith.constant dense<0.000000e+00> : vector<32x16xf32>
    %40 = tpu.matmul %38, %39, %cst_23 {dimension_numbers = #tpu.dot_dimension_numbers<[1], [0], [0], [1], [0, 0, 1, 1], [], []>} : vector<32x4xf32>, vector<4x16xf32>, vector<32x16xf32> -> vector<32x16xf32>
    %41 = arith.addf %36, %40 : vector<32x16xf32>
    %c0_24 = arith.constant 0 : index
    %c0_25 = arith.constant 0 : index
    %42 = vector.load %arg5[%c0_24, %c0_25] : memref<32x1xf32, #tpu.memory_space<vmem>>, vector<32x1xf32>
    %43 = vector.broadcast %42 : vector<32x1xf32> to vector<32x16xf32>
    %44 = arith.addf %41, %43 : vector<32x16xf32>
    %45 = vector.extract_strided_slice %44 {offsets = [0, 0], sizes = [16, 16], strides = [1, 1]} : vector<32x16xf32> to vector<16x16xf32>
    %46 = arith.negf %45 : vector<16x16xf32>
    %47 = math.exp %46 : vector<16x16xf32>
    %cst_26 = arith.constant 1.000000e+00 : f32
    %48 = vector.broadcast %cst_26 : f32 to vector<16x16xf32>
    %49 = arith.addf %48, %47 : vector<16x16xf32>
    %50 = arith.divf %48, %49 : vector<16x16xf32>
    %51 = vector.extract_strided_slice %44 {offsets = [16, 0], sizes = [16, 16], strides = [1, 1]} : vector<32x16xf32> to vector<16x16xf32>
    %52 = math.tanh %51 : vector<16x16xf32>
    %53 = arith.mulf %50, %52 : vector<16x16xf32>
    %c0_27 = arith.constant 0 : index
    %c0_28 = arith.constant 0 : index
    %c0_29 = arith.constant 0 : index
    %54 = vector.load %arg6[%c0_27, %c0_28, %c0_29] : memref<1x16x16xf32, #tpu.memory_space<vmem>>, vector<1x16x16xf32>
    %55 = vector.shape_cast %54 : vector<1x16x16xf32> to vector<16x16xf32>
    %56 = vector.shape_cast %53 : vector<16x16xf32> to vector<1x16x16xf32>
    tpu.vector_store %arg6[%c0_27, %c0_28, %c0_29], %56 {strides = array<i32>} : memref<1x16x16xf32, #tpu.memory_space<vmem>>, vector<1x16x16xf32>,
    return
  }
  func.func @transform_0(%arg0: i32, %arg1: i32) -> (i32, i32, i32) {
    %c0_i32 = arith.constant 0 : i32
    %c0_i32_0 = arith.constant 0 : i32
    return %arg0, %c0_i32, %arg1 : i32, i32, i32
  }
  func.func @transform_1(%arg0: i32, %arg1: i32) -> (i32, i32, i32) {
    %c1_i32 = arith.constant 1 : i32
    %0 = arith.subi %arg1, %c1_i32 : i32
    %c0_i32 = arith.constant 0 : i32
    %1 = arith.maxsi %0, %c0_i32 : i32
    %c0_i32_0 = arith.constant 0 : i32
    %c0_i32_1 = arith.constant 0 : i32
    return %arg0, %c0_i32_0, %1 : i32, i32, i32
  }
  func.func @transform_2(%arg0: i32, %arg1: i32) -> (i32, i32, i32) {
    %c0_i32 = arith.constant 0 : i32
    %c0_i32_0 = arith.constant 0 : i32
    %c0_i32_1 = arith.constant 0 : i32
    %c0_i32_2 = arith.constant 0 : i32
    return %c0_i32, %c0_i32_0, %c0_i32_1 : i32, i32, i32
  }
  func.func @transform_3(%arg0: i32, %arg1: i32) -> (i32, i32) {
    %c0_i32 = arith.constant 0 : i32
    %c0_i32_0 = arith.constant 0 : i32
    %c0_i32_1 = arith.constant 0 : i32
    return %c0_i32, %c0_i32_0 : i32, i32
  }
  func.func @transform_4(%arg0: i32, %arg1: i32) -> (i32, i32, i32) {
    %c0_i32 = arith.constant 0 : i32
    %c0_i32_0 = arith.constant 0 : i32
    return %arg0, %c0_i32, %arg1 : i32, i32, i32
  }
}

</mosaic_0001>

<llo_original>
// kernel: tpu_custom_call.1
$region0: #{tpu_custom_call.1}
  #allocation0 [shape = 'u32[]', space=smem, size = 0x4, offset = 0x4, fixed_abs, tag = 'smem constant byte address 0x4 - core index']
  #allocation1 [shape = 'u32[144,128]{1,0:T(1,128)}', space=vmem, size = 0x12000, scoped, tag = 'internal scratch']
  %s0 = inlined_call_operand.vmem [shape: f32[2,4,16], index: 0, kind: input, shape index: {}]
  %s1 = inlined_call_operand.vmem [shape: f32[2,4,16], index: 1, kind: input, shape index: {}]
  %s2 = inlined_call_operand.vmem [shape: f32[6,32,4], index: 2, kind: input, shape index: {}]
  %s3 = inlined_call_operand.vmem [shape: f32[32,1], index: 3, kind: input, shape index: {}]
  %s4 = inlined_call_operand.hbm [shape: f32[2,16,16], index: 4, kind: output, shape index: {}]
  %s5 = sld [smem:[#allocation0]]
  $region49: #{tpu_custom_call.1} parent=0
    _
  %s7 = ssub.s32 1, %s5
  %s8 = scalar_select 0, %s7, %s5
  $region1: #{tpu_custom_call.1} parent=0
    #allocation2 [shape = 'u8[16384]{0}', space=vmem, size = 0x4000, scoped, tag = 'output window, operand 0']
    #allocation3 [shape = 's32[2]{0}', space=sflag, size = 0x8, scoped, tag = 'scoped memory for tpu_custom_call.1']
    %9 = vsyncpa [#allocation3], 0
    %s10 = scalar_lea.sflag [#allocation3], 1
    %11 = vsyncpa %s10, 0
    loop: start=0, step=1, limit=4
    $region2: #{tpu_custom_call.1} parent=1 // loop_pre_header
      _
    $region3: #{tpu_custom_call.1} parent=1 // loop_header
      %s13 = sphi 0, %s17
      %p14 = scmp.ge.s32.totalorder %s13, 4
      %s20 = sphi 0, %s32
      %s21 = sphi 0, %s28
      %s22 = sphi 0, %s20
      %s23 = sphi 0, %s21
      %s24 = sphi 0, %s22
      %s25 = sphi 0, %s23
      %s37 = sphi 0, %s39
      %s40 = sphi 0, %s37
      %s41 = sphi 0, %s40
      %s57 = sphi 0, %s41
      %s71 = sphi 0, %s73
      %s74 = sphi 0, %s71
      %s75 = sphi 0, %s74
      %s91 = sphi 0, %s75
      %s95 = sphi 0, %s95
      %s97 = sphi 0, %s95
      %s98 = sphi 0, %s97
      %s112 = sphi 0, %s98
      %s116 = sphi 0, %s116
      %s118 = sphi 0, %s116
      %s119 = sphi 0, %s118
      %s133 = sphi 0, %s119
      %s141 = sphi 0, %s143
      %s144 = sphi 0, %s141
      %s145 = sphi 0, %s144
      %s161 = sphi 0, %s145
    $region4: #{tpu_custom_call.1} parent=1 // loop_header_branch
      %16 = sbr.rel (%p14) target = $region8
    $region5: #{tpu_custom_call.1} parent=1 // loop_body
      %s18 = ssub.s32 %s13, 1
      %s19 = ssub.s32 %s13, 2
      %s26 = sadd.s32 1, %s21
      %p27 = scmp.ge.s32.totalorder %s26, 1
      %s28 = scalar_select %p27, 0, %s26
      %s29 = sadd.s32 1, %s20
      %s30 = scalar_select %p27, %s29, %s20
      %p31 = scmp.ge.s32.totalorder %s30, 2
      %s32 = scalar_select %p31, 0, %s30
      %s33 = ssub.s32 %s20, %s32
      %s34 = ssub.s32 %s21, %s28
      %s35 = sor.u32 %s33, %s34
      %p36 = scmp.eq.s32.totalorder %s35, 0
      %s38 = sadd.s32 %s37, 1
      %s39 = scalar_select %p36, %s37, %s38
      %p42 = pneg %p36
      %p43 = scmp.eq.s32.totalorder %s13, 1
      %p44 = por %p42, %p43
      %p45 = scmp.ne.s32.totalorder %s37, %s40
      %p46 = scmp.eq.s32.totalorder %s13, 0
      %p47 = por %p45, %p46
      %p48 = scmp.ne.s32.totalorder %s37, %s40
      %p49 = scmp.eq.s32.totalorder %s18, 1
      %p50 = por %p48, %p49
      %p51 = scmp.ne.s32.totalorder %s40, %s41
      %p52 = scmp.eq.s32.totalorder %s18, 0
      %p53 = por %p51, %p52
      %p54 = scmp.ne.s32.totalorder %s40, %s41
      %p55 = scmp.eq.s32.totalorder %s19, 1
      %p56 = por %p54, %p55
      %p58 = scmp.ne.s32.totalorder %s41, %s57
      %p59 = scmp.eq.s32.totalorder %s19, 0
      %p60 = por %p58, %p59
      %s61 = ssub.s32 %s21, 1
      %p62 = scmp.gt.s32.totalorder %s61, 0
      %s63 = scalar_select %p62, %s61, 0
      %s64 = ssub.s32 %s28, 1
      %p65 = scmp.gt.s32.totalorder %s64, 0
      %s66 = scalar_select %p65, %s64, 0
      %s67 = ssub.s32 %s20, %s32
      %s68 = ssub.s32 %s63, %s66
      %s69 = sor.u32 %s67, %s68
      %p70 = scmp.eq.s32.totalorder %s69, 0
      %s72 = sadd.s32 %s71, 1
      %s73 = scalar_select %p70, %s71, %s72
      %p76 = pneg %p70
      %p77 = scmp.eq.s32.totalorder %s13, 1
      %p78 = por %p76, %p77
      %p79 = scmp.ne.s32.totalorder %s71, %s74
      %p80 = scmp.eq.s32.totalorder %s13, 0
      %p81 = por %p79, %p80
      %p82 = scmp.ne.s32.totalorder %s71, %s74
      %p83 = scmp.eq.s32.totalorder %s18, 1
      %p84 = por %p82, %p83
      %p85 = scmp.ne.s32.totalorder %s74, %s75
      %p86 = scmp.eq.s32.totalorder %s18, 0
      %p87 = por %p85, %p86
      %p88 = scmp.ne.s32.totalorder %s74, %s75
      %p89 = scmp.eq.s32.totalorder %s19, 1
      %p90 = por %p88, %p89
      %p92 = scmp.ne.s32.totalorder %s75, %s91
      %p93 = scmp.eq.s32.totalorder %s19, 0
      %p94 = por %p92, %p93
      %s96 = sadd.s32 %s95, 1
      %p99 = scmp.eq.s32.totalorder %s13, 1
      %p100 = scmp.ne.s32.totalorder %s95, %s97
      %p101 = scmp.eq.s32.totalorder %s13, 0
      %p102 = por %p100, %p101
      %p103 = scmp.ne.s32.totalorder %s95, %s97
      %p104 = scmp.eq.s32.totalorder %s18, 1
      %p105 = por %p103, %p104
      %p106 = scmp.ne.s32.totalorder %s97, %s98
      %p107 = scmp.eq.s32.totalorder %s18, 0
      %p108 = por %p106, %p107
      %p109 = scmp.ne.s32.totalorder %s97, %s98
      %p110 = scmp.eq.s32.totalorder %s19, 1
      %p111 = por %p109, %p110
      %p113 = scmp.ne.s32.totalorder %s98, %s112
      %p114 = scmp.eq.s32.totalorder %s19, 0
      %p115 = por %p113, %p114
      %s117 = sadd.s32 %s116, 1
      %p120 = scmp.eq.s32.totalorder %s13, 1
      %p121 = scmp.ne.s32.totalorder %s116, %s118
      %p122 = scmp.eq.s32.totalorder %s13, 0
      %p123 = por %p121, %p122
      %p124 = scmp.ne.s32.totalorder %s116, %s118
      %p125 = scmp.eq.s32.totalorder %s18, 1
      %p126 = por %p124, %p125
      %p127 = scmp.ne.s32.totalorder %s118, %s119
      %p128 = scmp.eq.s32.totalorder %s18, 0
      %p129 = por %p127, %p128
      %p130 = scmp.ne.s32.totalorder %s118, %s119
      %p131 = scmp.eq.s32.totalorder %s19, 1
      %p132 = por %p130, %p131
      %p134 = scmp.ne.s32.totalorder %s119, %s133
      %p135 = scmp.eq.s32.totalorder %s19, 0
      %p136 = por %p134, %p135
      %s137 = ssub.s32 %s20, %s32
      %s138 = ssub.s32 %s21, %s28
      %s139 = sor.u32 %s137, %s138
      %p140 = scmp.eq.s32.totalorder %s139, 0
      %s142 = sadd.s32 %s141, 1
      %s143 = scalar_select %p140, %s141, %s142
      %p146 = pneg %p140
      %p147 = scmp.eq.s32.totalorder %s13, 1
      %p148 = por %p146, %p147
      %p149 = scmp.ne.s32.totalorder %s141, %s144
      %p150 = scmp.eq.s32.totalorder %s13, 0
      %p151 = por %p149, %p150
      %p152 = scmp.ne.s32.totalorder %s141, %s144
      %p153 = scmp.eq.s32.totalorder %s18, 1
      %p154 = por %p152, %p153
      %p155 = scmp.ne.s32.totalorder %s144, %s145
      %p156 = scmp.eq.s32.totalorder %s18, 0
      %p157 = por %p155, %p156
      %p158 = scmp.ne.s32.totalorder %s144, %s145
      %p159 = scmp.eq.s32.totalorder %s19, 1
      %p160 = por %p158, %p159
      %p162 = scmp.ne.s32.totalorder %s145, %s161
      %p163 = scmp.eq.s32.totalorder %s19, 0
      %p164 = por %p162, %p163
      %p165 = scmp.le.s32.totalorder 1, %s13
      %p166 = scmp.lt.s32.totalorder %s13, 3
      %p167 = pnand %p165, %p166
      %p168 = pneg %p167
      // Predicated region
      $region9: #{tpu_custom_call.1} parent=5 // pred_check
        _
      $region10: #{tpu_custom_call.1} parent=5 // pred_check_branch
        %170 = sbr.rel (%p167) target = $region12
      $region11: #{tpu_custom_call.1} parent=5 // pred_region
        %s171 = ssub.s32 %s13, 1
        // Predicated region
        $region13: #{tpu_custom_call.1} parent=11 // pred_check
          %p172 = pneg %p108
        $region14: #{tpu_custom_call.1} parent=11 // pred_check_branch
          %174 = sbr.rel (%p172) target = $region16
        $region15: #{tpu_custom_call.1} parent=11 // pred_region
          _
        $region16: #{tpu_custom_call.1} parent=11 // pred_fallthru
          _
        // Predicated region
        $region17: #{tpu_custom_call.1} parent=11 // pred_check
          %p175 = pneg %p129
        $region18: #{tpu_custom_call.1} parent=11 // pred_check_branch
          %177 = sbr.rel (%p175) target = $region20
        $region19: #{tpu_custom_call.1} parent=11 // pred_region
          _
        $region20: #{tpu_custom_call.1} parent=11 // pred_fallthru
          _
      $region12: #{tpu_custom_call.1} parent=5 // pred_fallthru
        _
      %p178 = scmp.lt.s32.totalorder %s13, 2
      // Predicated region
      $region21: #{tpu_custom_call.1} parent=5 // pred_check
        %p179 = pneg %p178
      $region22: #{tpu_custom_call.1} parent=5 // pred_check_branch
        %181 = sbr.rel (%p179) target = $region24
      $region23: #{tpu_custom_call.1} parent=5 // pred_region
        // Predicated region
        $region25: #{tpu_custom_call.1} parent=23 // pred_check
          %p182 = pneg %p47
        $region26: #{tpu_custom_call.1} parent=23 // pred_check_branch
          %184 = sbr.rel (%p182) target = $region28
        $region27: #{tpu_custom_call.1} parent=23 // pred_region
          %p185 = scmp.lt.s32.totalorder %s20, 1
          %s186 = scalar_select %p185, %s20, 1
          %p187 = scmp.lt.s32.totalorder %s21, 0
          %s188 = scalar_select %p187, %s21, 0
          %s189 = sadd.s32 %s188, %s186
          %s190 = smul.addr %s189, 4
          %s191 = scalar_lea.vmem %s0, %s190
        $region28: #{tpu_custom_call.1} parent=23 // pred_fallthru
          _
        // Predicated region
        $region29: #{tpu_custom_call.1} parent=23 // pred_check
          %p192 = pneg %p81
        $region30: #{tpu_custom_call.1} parent=23 // pred_check_branch
          %194 = sbr.rel (%p192) target = $region32
        $region31: #{tpu_custom_call.1} parent=23 // pred_region
          %s195 = ssub.s32 %s21, 1
          %p196 = scmp.gt.s32.totalorder %s195, 0
          %s197 = scalar_select %p196, %s195, 0
          %p198 = scmp.lt.s32.totalorder %s20, 1
          %s199 = scalar_select %p198, %s20, 1
          %p200 = scmp.lt.s32.totalorder %s197, 0
          %s201 = scalar_select %p200, %s197, 0
          %s202 = sadd.s32 %s201, %s199
          %s203 = smul.addr %s202, 4
          %s204 = scalar_lea.vmem %s1, %s203
          %s205 = ssub.s32 %s21, 1
          %p206 = scmp.gt.s32.totalorder %s205, 0
          %s207 = scalar_select %p206, %s205, 0
        $region32: #{tpu_custom_call.1} parent=23 // pred_fallthru
          _
      $region24: #{tpu_custom_call.1} parent=5 // pred_fallthru
        _
      %p208 = scmp.le.s32.totalorder 1, %s13
      %p209 = scmp.lt.s32.totalorder %s13, 3
      %p210 = pnand %p208, %p209
      %p211 = pneg %p210
      // Predicated region
      $region33: #{tpu_custom_call.1} parent=5 // pred_check
        _
      $region34: #{tpu_custom_call.1} parent=5 // pred_check_branch
        %213 = sbr.rel (%p210) target = $region36
      $region35: #{tpu_custom_call.1} parent=5 // pred_region
        %s214 = ssub.s32 %s13, 1
        %p215 = scmp.lt.s32.totalorder %s22, 1
        %s216 = scalar_select %p215, %s22, 1
        %p217 = scmp.lt.s32.totalorder %s23, 0
        %s218 = scalar_select %p217, %s23, 0
        %s219 = sadd.s32 %s218, %s216
        %s220 = smul.addr %s219, 4
        %s221 = scalar_lea.vmem %s0, %s220
        %p222 = pneg %p53
        %p223 = pneg %p50
        %s224 = ssub.s32 %s23, 1
        %p225 = scmp.gt.s32.totalorder %s224, 0
        %s226 = scalar_select %p225, %s224, 0
        %p227 = scmp.lt.s32.totalorder %s22, 1
        %s228 = scalar_select %p227, %s22, 1
        %p229 = scmp.lt.s32.totalorder %s226, 0
        %s230 = scalar_select %p229, %s226, 0
        %s231 = sadd.s32 %s230, %s228
        %s232 = smul.addr %s231, 4
        %s233 = scalar_lea.vmem %s1, %s232
        %p234 = pneg %p87
        %p235 = pneg %p84
        %p236 = pneg %p108
        %p237 = pneg %p105
        %p238 = pneg %p129
        %p239 = pneg %p126
        %p240 = pneg %p157
        %p241 = pneg %p154
        %s242 = sand.u32 %s144, 1
        %s243 = scalar_lea.sflag [#allocation3], %s242
        %s244 = sand.u32 %s144, 1
        %s245 = smul.addr %s244, 16
        %s246 = scalar_lea.vmem [#allocation2], %s245
        %p247 = scmp.lt.s32.totalorder %s22, 1
        %s248 = scalar_select %p247, %s22, 1
        %p249 = scmp.lt.s32.totalorder %s23, 0
        %s250 = scalar_select %p249, %s23, 0
        %s251 = sadd.s32 %s250, %s248
        %s252 = smul.addr %s251, 4
        %s253 = scalar_lea.vmem %s0, %s252
        %s254 = ssub.s32 %s23, 1
        %p255 = scmp.gt.s32.totalorder %s254, 0
        %s256 = scalar_select %p255, %s254, 0
        %p257 = scmp.lt.s32.totalorder %s22, 1
        %s258 = scalar_select %p257, %s22, 1
        %p259 = scmp.lt.s32.totalorder %s256, 0
        %s260 = scalar_select %p259, %s256, 0
        %s261 = sadd.s32 %s260, %s258
        %s262 = smul.addr %s261, 4
        %s263 = scalar_lea.vmem %s1, %s262
        %s264 = ssub.s32 %s23, 1
        %p265 = scmp.gt.s32.totalorder %s264, 0
        %s266 = scalar_select %p265, %s264, 0
        %v267 = vld [vmem:[%s253] sm:$0xf]
        %p268 = scmp.gt.s32.totalorder %s23, 0
        %s269 = scalar_select %p268, 1, 0
        %s270 = scvt.s32.f32 %s269
        %v271 = vld [vmem:[%s263] sm:$0xf]
        %v272 = vstv %s270
        %v273 = vmul.f32 %v271, %v272
        %275 = vrot.lane.b32.xlu0 %v273, 117
        %v276 = vpop.permute.xlu0 %275
        %279 = vrot.lane.b32.xlu0 %v267, 5
        %v280 = vpop.permute.xlu0 %279
        %vm282 = vcmask 39936
        %v283 = vsel %vm282, %v276, %v280
        %v284 = vld [vmem:[%s2] sm:$0xff]
        %v285 = vld [vmem:[%s2 + $0x8] sm:$0xff]
        %v286 = vld [vmem:[%s2 + $0x10] sm:$0xff]
        %v287 = vld [vmem:[%s2 + $0x18] sm:$0xff]
        %s288 = scalar_lea.vmem %s2, 32
        %v289 = vld [vmem:[%s288] sm:$0xff]
        %v290 = vld [vmem:[%s288 + $0x8] sm:$0xff]
        %v291 = vld [vmem:[%s288 + $0x10] sm:$0xff]
        %v292 = vld [vmem:[%s288 + $0x18] sm:$0xff]
        %294 = vrot.lane.b32.xlu0 %v283, 127
        %v295 = vpop.permute.xlu0 %294
        %vm296 = vcmask 31744
        %v298 = vsel %vm296, %v289, 0
        %v301 = vsel %vm296, %v290, 0
        %v304 = vsel %vm296, %v291, 0
        %v307 = vsel %vm296, %v292, 0
        %vm309 = vcmask 1043456
        %v310 = vsel %vm309, %v295, 0
        %312 = vmatprep.subr.mxu0 0.0
        %313 = vmatpush1.msra.mxu0 0.0
        %314 = vmatprep.subr.mxu0 0.0
        %315 = vmatpush1.msra.mxu0 0.0
        %316 = vmatprep.subr.mxu0 0.0
        %317 = vmatpush1.msra.mxu0 0.0
        %318 = vmatprep.subr.mxu0 0.0
        %319 = vmatpush1.msra.mxu0 0.0
        %320 = vmatprep.subr.mxu0 0.0
        %321 = vmatpush1.msra.mxu0 0.0
        %322 = vmatprep.subr.mxu0 0.0
        %323 = vmatpush1.msra.mxu0 0.0
        %324 = vmatprep.subr.mxu0 0.0
        %325 = vmatpush1.msra.mxu0 0.0
        %326 = vmatprep.subr.mxu0 0.0
        %327 = vmatpush1.msra.mxu0 0.0
        %328 = vmatprep.subr.mxu0 0.0
        %329 = vmatpush1.msra.mxu0 0.0
        %330 = vmatprep.subr.mxu0 0.0
        %331 = vmatpush1.msra.mxu0 0.0
        %332 = vmatprep.subr.mxu0 0.0
        %333 = vmatpush1.msra.mxu0 0.0
        %334 = vmatprep.subr.mxu0 0.0
        %335 = vmatpush1.msra.mxu0 0.0
        %336 = vmatprep.subr.mxu0 0.0
        %337 = vmatpush1.msra.mxu0 0.0
        %338 = vmatprep.subr.mxu0 0.0
        %339 = vmatpush1.msra.mxu0 0.0
        %340 = vmatprep.subr.mxu0 0.0
        %341 = vmatpush1.msra.mxu0 0.0
        %342 = vmatprep.subr.mxu0 0.0
        %343 = vmatpush1.msra.mxu0 %v310
        %344 = vmatprep.subr.mxu0 0.0
        %345 = vmatpush2.msra.mxu0 0.0
        %346 = vmatprep.subr.mxu0 0.0
        %347 = vmatpush2.msra.mxu0 0.0
        %348 = vmatprep.subr.mxu0 0.0
        %349 = vmatpush2.msra.mxu0 0.0
        %350 = vmatprep.subr.mxu0 0.0
        %351 = vmatpush2.msra.mxu0 0.0
        %352 = vmatprep.subr.mxu0 0.0
        %353 = vmatpush2.msra.mxu0 0.0
        %354 = vmatprep.subr.mxu0 0.0
        %355 = vmatpush2.msra.mxu0 0.0
        %356 = vmatprep.subr.mxu0 0.0
        %357 = vmatpush2.msra.mxu0 0.0
        %358 = vmatprep.subr.mxu0 0.0
        %359 = vmatpush2.msra.mxu0 0.0
        %360 = vmatprep.subr.mxu0 0.0
        %361 = vmatpush2.msra.mxu0 0.0
        %362 = vmatprep.subr.mxu0 0.0
        %363 = vmatpush2.msra.mxu0 0.0
        %364 = vmatprep.subr.mxu0 0.0
        %365 = vmatpush2.msra.mxu0 0.0
        %366 = vmatprep.subr.mxu0 0.0
        %367 = vmatpush2.msra.mxu0 0.0
        %368 = vmatprep.subr.mxu0 0.0
        %369 = vmatpush2.msra.mxu0 0.0
        %370 = vmatprep.subr.mxu0 0.0
        %371 = vmatpush2.msra.mxu0 0.0
        %372 = vmatprep.subr.mxu0 0.0
        %373 = vmatpush2.msra.mxu0 0.0
        %374 = vmatprep.subr.mxu0 0.0
        %375 = vmatpush2.msra.mxu0 0.0
        %376 = vmatprep.mubr.f32.mxu0 0.0
        %377 = vmatmul.mubr.f32.gmra.mxu0 %v298
        %v378 = vpop.f32.mrf.mxu0
        %v379 = vadd.f32 0.0, %v378
        %v380 = vpop.f32.mrf.mxu0
        %381 = vmatprep.mubr.f32.mxu0 0.0
        %382 = vmatmul.mubr.f32.gmra.mxu0 %v301
        %v383 = vpop.f32.mrf.mxu0
        %v384 = vadd.f32 0.0, %v383
        %v385 = vpop.f32.mrf.mxu0
        %386 = vmatprep.mubr.f32.mxu0 0.0
        %387 = vmatmul.mubr.f32.gmra.mxu0 %v304
        %v388 = vpop.f32.mrf.mxu0
        %v389 = vadd.f32 0.0, %v388
        %v390 = vpop.f32.mrf.mxu0
        %391 = vmatprep.mubr.f32.mxu0 0.0
        %392 = vmatmul.mubr.f32.gmra.mxu0 %v307
        %v393 = vpop.f32.mrf.mxu0
        %v394 = vadd.f32 0.0, %v393
        %v395 = vpop.f32.mrf.mxu0
        %396 = vdwg.mxu0
        %v398 = vsel %vm296, %v284, 0
        %v401 = vsel %vm296, %v285, 0
        %v404 = vsel %vm296, %v286, 0
        %v407 = vsel %vm296, %v287, 0
        %v409 = vsel %vm309, %v283, 0
        %411 = vmatprep.subr.mxu0 0.0
        %412 = vmatpush1.msra.mxu0 0.0
        %413 = vmatprep.subr.mxu0 0.0
        %414 = vmatpush1.msra.mxu0 0.0
        %415 = vmatprep.subr.mxu0 0.0
        %416 = vmatpush1.msra.mxu0 0.0
        %417 = vmatprep.subr.mxu0 0.0
        %418 = vmatpush1.msra.mxu0 0.0
        %419 = vmatprep.subr.mxu0 0.0
        %420 = vmatpush1.msra.mxu0 0.0
        %421 = vmatprep.subr.mxu0 0.0
        %422 = vmatpush1.msra.mxu0 0.0
        %423 = vmatprep.subr.mxu0 0.0
        %424 = vmatpush1.msra.mxu0 0.0
        %425 = vmatprep.subr.mxu0 0.0
        %426 = vmatpush1.msra.mxu0 0.0
        %427 = vmatprep.subr.mxu0 0.0
        %428 = vmatpush1.msra.mxu0 0.0
        %429 = vmatprep.subr.mxu0 0.0
        %430 = vmatpush1.msra.mxu0 0.0
        %431 = vmatprep.subr.mxu0 0.0
        %432 = vmatpush1.msra.mxu0 0.0
        %433 = vmatprep.subr.mxu0 0.0
        %434 = vmatpush1.msra.mxu0 0.0
        %435 = vmatprep.subr.mxu0 0.0
        %436 = vmatpush1.msra.mxu0 0.0
        %437 = vmatprep.subr.mxu0 0.0
        %438 = vmatpush1.msra.mxu0 0.0
        %439 = vmatprep.subr.mxu0 0.0
        %440 = vmatpush1.msra.mxu0 0.0
        %441 = vmatprep.subr.mxu0 0.0
        %442 = vmatpush1.msra.mxu0 %v409
        %443 = vmatprep.subr.mxu0 0.0
        %444 = vmatpush2.msra.mxu0 0.0
        %445 = vmatprep.subr.mxu0 0.0
        %446 = vmatpush2.msra.mxu0 0.0
        %447 = vmatprep.subr.mxu0 0.0
        %448 = vmatpush2.msra.mxu0 0.0
        %449 = vmatprep.subr.mxu0 0.0
        %450 = vmatpush2.msra.mxu0 0.0
        %451 = vmatprep.subr.mxu0 0.0
        %452 = vmatpush2.msra.mxu0 0.0
        %453 = vmatprep.subr.mxu0 0.0
        %454 = vmatpush2.msra.mxu0 0.0
        %455 = vmatprep.subr.mxu0 0.0
        %456 = vmatpush2.msra.mxu0 0.0
        %457 = vmatprep.subr.mxu0 0.0
        %458 = vmatpush2.msra.mxu0 0.0
        %459 = vmatprep.subr.mxu0 0.0
        %460 = vmatpush2.msra.mxu0 0.0
        %461 = vmatprep.subr.mxu0 0.0
        %462 = vmatpush2.msra.mxu0 0.0
        %463 = vmatprep.subr.mxu0 0.0
        %464 = vmatpush2.msra.mxu0 0.0
        %465 = vmatprep.subr.mxu0 0.0
        %466 = vmatpush2.msra.mxu0 0.0
        %467 = vmatprep.subr.mxu0 0.0
        %468 = vmatpush2.msra.mxu0 0.0
        %469 = vmatprep.subr.mxu0 0.0
        %470 = vmatpush2.msra.mxu0 0.0
        %471 = vmatprep.subr.mxu0 0.0
        %472 = vmatpush2.msra.mxu0 0.0
        %473 = vmatprep.subr.mxu0 0.0
        %474 = vmatpush2.msra.mxu0 0.0
        %475 = vmatprep.mubr.f32.mxu0 0.0
        %476 = vmatmul.mubr.f32.gmra.mxu0 %v398
        %v477 = vpop.f32.mrf.mxu0
        %v478 = vadd.f32 %v379, %v477
        %v479 = vpop.f32.mrf.mxu0
        %480 = vmatprep.mubr.f32.mxu0 0.0
        %481 = vmatmul.mubr.f32.gmra.mxu0 %v401
        %v482 = vpop.f32.mrf.mxu0
        %v483 = vadd.f32 %v384, %v482
        %v484 = vpop.f32.mrf.mxu0
        %485 = vmatprep.mubr.f32.mxu0 0.0
        %486 = vmatmul.mubr.f32.gmra.mxu0 %v404
        %v487 = vpop.f32.mrf.mxu0
        %v488 = vadd.f32 %v389, %v487
        %v489 = vpop.f32.mrf.mxu0
        %490 = vmatprep.mubr.f32.mxu0 0.0
        %491 = vmatmul.mubr.f32.gmra.mxu0 %v407
        %v492 = vpop.f32.mrf.mxu0
        %v493 = vadd.f32 %v394, %v492
        %v494 = vpop.f32.mrf.mxu0
        %495 = vdwg.mxu0
        %s496 = scalar_lea.vmem %s2, 64
        %v497 = vld [vmem:[%s496] sm:$0xff]
        %v498 = vld [vmem:[%s496 + $0x8] sm:$0xff]
        %v499 = vld [vmem:[%s496 + $0x10] sm:$0xff]
        %v500 = vld [vmem:[%s496 + $0x18] sm:$0xff]
        %501 = vrot.lane.b32.xlu0 %v283, 126
        %v502 = vpop.permute.xlu0 %501
        %v504 = vsel %vm296, %v497, 0
        %v507 = vsel %vm296, %v498, 0
        %v510 = vsel %vm296, %v499, 0
        %v513 = vsel %vm296, %v500, 0
        %v515 = vsel %vm309, %v502, 0
        %517 = vmatprep.subr.mxu0 0.0
        %518 = vmatpush1.msra.mxu0 0.0
        %519 = vmatprep.subr.mxu0 0.0
        %520 = vmatpush1.msra.mxu0 0.0
        %521 = vmatprep.subr.mxu0 0.0
        %522 = vmatpush1.msra.mxu0 0.0
        %523 = vmatprep.subr.mxu0 0.0
        %524 = vmatpush1.msra.mxu0 0.0
        %525 = vmatprep.subr.mxu0 0.0
        %526 = vmatpush1.msra.mxu0 0.0
        %527 = vmatprep.subr.mxu0 0.0
        %528 = vmatpush1.msra.mxu0 0.0
        %529 = vmatprep.subr.mxu0 0.0
        %530 = vmatpush1.msra.mxu0 0.0
        %531 = vmatprep.subr.mxu0 0.0
        %532 = vmatpush1.msra.mxu0 0.0
        %533 = vmatprep.subr.mxu0 0.0
        %534 = vmatpush1.msra.mxu0 0.0
        %535 = vmatprep.subr.mxu0 0.0
        %536 = vmatpush1.msra.mxu0 0.0
        %537 = vmatprep.subr.mxu0 0.0
        %538 = vmatpush1.msra.mxu0 0.0
        %539 = vmatprep.subr.mxu0 0.0
        %540 = vmatpush1.msra.mxu0 0.0
        %541 = vmatprep.subr.mxu0 0.0
        %542 = vmatpush1.msra.mxu0 0.0
        %543 = vmatprep.subr.mxu0 0.0
        %544 = vmatpush1.msra.mxu0 0.0
        %545 = vmatprep.subr.mxu0 0.0
        %546 = vmatpush1.msra.mxu0 0.0
        %547 = vmatprep.subr.mxu0 0.0
        %548 = vmatpush1.msra.mxu0 %v515
        %549 = vmatprep.subr.mxu0 0.0
        %550 = vmatpush2.msra.mxu0 0.0
        %551 = vmatprep.subr.mxu0 0.0
        %552 = vmatpush2.msra.mxu0 0.0
        %553 = vmatprep.subr.mxu0 0.0
        %554 = vmatpush2.msra.mxu0 0.0
        %555 = vmatprep.subr.mxu0 0.0
        %556 = vmatpush2.msra.mxu0 0.0
        %557 = vmatprep.subr.mxu0 0.0
        %558 = vmatpush2.msra.mxu0 0.0
        %559 = vmatprep.subr.mxu0 0.0
        %560 = vmatpush2.msra.mxu0 0.0
        %561 = vmatprep.subr.mxu0 0.0
        %562 = vmatpush2.msra.mxu0 0.0
        %563 = vmatprep.subr.mxu0 0.0
        %564 = vmatpush2.msra.mxu0 0.0
        %565 = vmatprep.subr.mxu0 0.0
        %566 = vmatpush2.msra.mxu0 0.0
        %567 = vmatprep.subr.mxu0 0.0
        %568 = vmatpush2.msra.mxu0 0.0
        %569 = vmatprep.subr.mxu0 0.0
        %570 = vmatpush2.msra.mxu0 0.0
        %571 = vmatprep.subr.mxu0 0.0
        %572 = vmatpush2.msra.mxu0 0.0
        %573 = vmatprep.subr.mxu0 0.0
        %574 = vmatpush2.msra.mxu0 0.0
        %575 = vmatprep.subr.mxu0 0.0
        %576 = vmatpush2.msra.mxu0 0.0
        %577 = vmatprep.subr.mxu0 0.0
        %578 = vmatpush2.msra.mxu0 0.0
        %579 = vmatprep.subr.mxu0 0.0
        %580 = vmatpush2.msra.mxu0 0.0
        %581 = vmatprep.mubr.f32.mxu0 0.0
        %582 = vmatmul.mubr.f32.gmra.mxu0 %v504
        %v583 = vpop.f32.mrf.mxu0
        %v584 = vadd.f32 0.0, %v583
        %v585 = vpop.f32.mrf.mxu0
        %586 = vmatprep.mubr.f32.mxu0 0.0
        %587 = vmatmul.mubr.f32.gmra.mxu0 %v507
        %v588 = vpop.f32.mrf.mxu0
        %v589 = vadd.f32 0.0, %v588
        %v590 = vpop.f32.mrf.mxu0
        %591 = vmatprep.mubr.f32.mxu0 0.0
        %592 = vmatmul.mubr.f32.gmra.mxu0 %v510
        %v593 = vpop.f32.mrf.mxu0
        %v594 = vadd.f32 0.0, %v593
        %v595 = vpop.f32.mrf.mxu0
        %596 = vmatprep.mubr.f32.mxu0 0.0
        %597 = vmatmul.mubr.f32.gmra.mxu0 %v513
        %v598 = vpop.f32.mrf.mxu0
        %v599 = vadd.f32 0.0, %v598
        %v600 = vpop.f32.mrf.mxu0
        %601 = vdwg.mxu0
        %v602 = vadd.f32 %v478, %v584
        %v603 = vadd.f32 %v483, %v589
        %v604 = vadd.f32 %v488, %v594
        %v605 = vadd.f32 %v493, %v599
        %s606 = scalar_lea.vmem %s2, 96
        %v607 = vld [vmem:[%s606] sm:$0xff]
        %v608 = vld [vmem:[%s606 + $0x8] sm:$0xff]
        %v609 = vld [vmem:[%s606 + $0x10] sm:$0xff]
        %v610 = vld [vmem:[%s606 + $0x18] sm:$0xff]
        %611 = vrot.lane.b32.xlu0 %v283, 125
        %v612 = vpop.permute.xlu0 %611
        %v614 = vsel %vm296, %v607, 0
        %v617 = vsel %vm296, %v608, 0
        %v620 = vsel %vm296, %v609, 0
        %v623 = vsel %vm296, %v610, 0
        %v625 = vsel %vm309, %v612, 0
        %627 = vmatprep.subr.mxu0 0.0
        %628 = vmatpush1.msra.mxu0 0.0
        %629 = vmatprep.subr.mxu0 0.0
        %630 = vmatpush1.msra.mxu0 0.0
        %631 = vmatprep.subr.mxu0 0.0
        %632 = vmatpush1.msra.mxu0 0.0
        %633 = vmatprep.subr.mxu0 0.0
        %634 = vmatpush1.msra.mxu0 0.0
        %635 = vmatprep.subr.mxu0 0.0
        %636 = vmatpush1.msra.mxu0 0.0
        %637 = vmatprep.subr.mxu0 0.0
        %638 = vmatpush1.msra.mxu0 0.0
        %639 = vmatprep.subr.mxu0 0.0
        %640 = vmatpush1.msra.mxu0 0.0
        %641 = vmatprep.subr.mxu0 0.0
        %642 = vmatpush1.msra.mxu0 0.0
        %643 = vmatprep.subr.mxu0 0.0
        %644 = vmatpush1.msra.mxu0 0.0
        %645 = vmatprep.subr.mxu0 0.0
        %646 = vmatpush1.msra.mxu0 0.0
        %647 = vmatprep.subr.mxu0 0.0
        %648 = vmatpush1.msra.mxu0 0.0
        %649 = vmatprep.subr.mxu0 0.0
        %650 = vmatpush1.msra.mxu0 0.0
        %651 = vmatprep.subr.mxu0 0.0
        %652 = vmatpush1.msra.mxu0 0.0
        %653 = vmatprep.subr.mxu0 0.0
        %654 = vmatpush1.msra.mxu0 0.0
        %655 = vmatprep.subr.mxu0 0.0
        %656 = vmatpush1.msra.mxu0 0.0
        %657 = vmatprep.subr.mxu0 0.0
        %658 = vmatpush1.msra.mxu0 %v625
        %659 = vmatprep.subr.mxu0 0.0
        %660 = vmatpush2.msra.mxu0 0.0
        %661 = vmatprep.subr.mxu0 0.0
        %662 = vmatpush2.msra.mxu0 0.0
        %663 = vmatprep.subr.mxu0 0.0
        %664 = vmatpush2.msra.mxu0 0.0
        %665 = vmatprep.subr.mxu0 0.0
        %666 = vmatpush2.msra.mxu0 0.0
        %667 = vmatprep.subr.mxu0 0.0
        %668 = vmatpush2.msra.mxu0 0.0
        %669 = vmatprep.subr.mxu0 0.0
        %670 = vmatpush2.msra.mxu0 0.0
        %671 = vmatprep.subr.mxu0 0.0
        %672 = vmatpush2.msra.mxu0 0.0
        %673 = vmatprep.subr.mxu0 0.0
        %674 = vmatpush2.msra.mxu0 0.0
        %675 = vmatprep.subr.mxu0 0.0
        %676 = vmatpush2.msra.mxu0 0.0
        %677 = vmatprep.subr.mxu0 0.0
        %678 = vmatpush2.msra.mxu0 0.0
        %679 = vmatprep.subr.mxu0 0.0
        %680 = vmatpush2.msra.mxu0 0.0
        %681 = vmatprep.subr.mxu0 0.0
        %682 = vmatpush2.msra.mxu0 0.0
        %683 = vmatprep.subr.mxu0 0.0
        %684 = vmatpush2.msra.mxu0 0.0
        %685 = vmatprep.subr.mxu0 0.0
        %686 = vmatpush2.msra.mxu0 0.0
        %687 = vmatprep.subr.mxu0 0.0
        %688 = vmatpush2.msra.mxu0 0.0
        %689 = vmatprep.subr.mxu0 0.0
        %690 = vmatpush2.msra.mxu0 0.0
        %691 = vmatprep.mubr.f32.mxu0 0.0
        %692 = vmatmul.mubr.f32.gmra.mxu0 %v614
        %v693 = vpop.f32.mrf.mxu0
        %v694 = vadd.f32 0.0, %v693
        %v695 = vpop.f32.mrf.mxu0
        %696 = vmatprep.mubr.f32.mxu0 0.0
        %697 = vmatmul.mubr.f32.gmra.mxu0 %v617
        %v698 = vpop.f32.mrf.mxu0
        %v699 = vadd.f32 0.0, %v698
        %v700 = vpop.f32.mrf.mxu0
        %701 = vmatprep.mubr.f32.mxu0 0.0
        %702 = vmatmul.mubr.f32.gmra.mxu0 %v620
        %v703 = vpop.f32.mrf.mxu0
        %v704 = vadd.f32 0.0, %v703
        %v705 = vpop.f32.mrf.mxu0
        %706 = vmatprep.mubr.f32.mxu0 0.0
        %707 = vmatmul.mubr.f32.gmra.mxu0 %v623
        %v708 = vpop.f32.mrf.mxu0
        %v709 = vadd.f32 0.0, %v708
        %v710 = vpop.f32.mrf.mxu0
        %711 = vdwg.mxu0
        %v712 = vadd.f32 %v602, %v694
        %v713 = vadd.f32 %v603, %v699
        %v714 = vadd.f32 %v604, %v704
        %v715 = vadd.f32 %v605, %v709
        %s716 = scalar_lea.vmem %s2, 128
        %v717 = vld [vmem:[%s716] sm:$0xff]
        %v718 = vld [vmem:[%s716 + $0x8] sm:$0xff]
        %v719 = vld [vmem:[%s716 + $0x10] sm:$0xff]
        %v720 = vld [vmem:[%s716 + $0x18] sm:$0xff]
        %721 = vrot.lane.b32.xlu0 %v283, 124
        %v722 = vpop.permute.xlu0 %721
        %v724 = vsel %vm296, %v717, 0
        %v727 = vsel %vm296, %v718, 0
        %v730 = vsel %vm296, %v719, 0
        %v733 = vsel %vm296, %v720, 0
        %v735 = vsel %vm309, %v722, 0
        %737 = vmatprep.subr.mxu0 0.0
        %738 = vmatpush1.msra.mxu0 0.0
        %739 = vmatprep.subr.mxu0 0.0
        %740 = vmatpush1.msra.mxu0 0.0
        %741 = vmatprep.subr.mxu0 0.0
        %742 = vmatpush1.msra.mxu0 0.0
        %743 = vmatprep.subr.mxu0 0.0
        %744 = vmatpush1.msra.mxu0 0.0
        %745 = vmatprep.subr.mxu0 0.0
        %746 = vmatpush1.msra.mxu0 0.0
        %747 = vmatprep.subr.mxu0 0.0
        %748 = vmatpush1.msra.mxu0 0.0
        %749 = vmatprep.subr.mxu0 0.0
        %750 = vmatpush1.msra.mxu0 0.0
        %751 = vmatprep.subr.mxu0 0.0
        %752 = vmatpush1.msra.mxu0 0.0
        %753 = vmatprep.subr.mxu0 0.0
        %754 = vmatpush1.msra.mxu0 0.0
        %755 = vmatprep.subr.mxu0 0.0
        %756 = vmatpush1.msra.mxu0 0.0
        %757 = vmatprep.subr.mxu0 0.0
        %758 = vmatpush1.msra.mxu0 0.0
        %759 = vmatprep.subr.mxu0 0.0
        %760 = vmatpush1.msra.mxu0 0.0
        %761 = vmatprep.subr.mxu0 0.0
        %762 = vmatpush1.msra.mxu0 0.0
        %763 = vmatprep.subr.mxu0 0.0
        %764 = vmatpush1.msra.mxu0 0.0
        %765 = vmatprep.subr.mxu0 0.0
        %766 = vmatpush1.msra.mxu0 0.0
        %767 = vmatprep.subr.mxu0 0.0
        %768 = vmatpush1.msra.mxu0 %v735
        %769 = vmatprep.subr.mxu0 0.0
        %770 = vmatpush2.msra.mxu0 0.0
        %771 = vmatprep.subr.mxu0 0.0
        %772 = vmatpush2.msra.mxu0 0.0
        %773 = vmatprep.subr.mxu0 0.0
        %774 = vmatpush2.msra.mxu0 0.0
        %775 = vmatprep.subr.mxu0 0.0
        %776 = vmatpush2.msra.mxu0 0.0
        %777 = vmatprep.subr.mxu0 0.0
        %778 = vmatpush2.msra.mxu0 0.0
        %779 = vmatprep.subr.mxu0 0.0
        %780 = vmatpush2.msra.mxu0 0.0
        %781 = vmatprep.subr.mxu0 0.0
        %782 = vmatpush2.msra.mxu0 0.0
        %783 = vmatprep.subr.mxu0 0.0
        %784 = vmatpush2.msra.mxu0 0.0
        %785 = vmatprep.subr.mxu0 0.0
        %786 = vmatpush2.msra.mxu0 0.0
        %787 = vmatprep.subr.mxu0 0.0
        %788 = vmatpush2.msra.mxu0 0.0
        %789 = vmatprep.subr.mxu0 0.0
        %790 = vmatpush2.msra.mxu0 0.0
        %791 = vmatprep.subr.mxu0 0.0
        %792 = vmatpush2.msra.mxu0 0.0
        %793 = vmatprep.subr.mxu0 0.0
        %794 = vmatpush2.msra.mxu0 0.0
        %795 = vmatprep.subr.mxu0 0.0
        %796 = vmatpush2.msra.mxu0 0.0
        %797 = vmatprep.subr.mxu0 0.0
        %798 = vmatpush2.msra.mxu0 0.0
        %799 = vmatprep.subr.mxu0 0.0
        %800 = vmatpush2.msra.mxu0 0.0
        %801 = vmatprep.mubr.f32.mxu0 0.0
        %802 = vmatmul.mubr.f32.gmra.mxu0 %v724
        %v803 = vpop.f32.mrf.mxu0
        %v804 = vadd.f32 0.0, %v803
        %v805 = vpop.f32.mrf.mxu0
        %806 = vmatprep.mubr.f32.mxu0 0.0
        %807 = vmatmul.mubr.f32.gmra.mxu0 %v727
        %v808 = vpop.f32.mrf.mxu0
        %v809 = vadd.f32 0.0, %v808
        %v810 = vpop.f32.mrf.mxu0
        %811 = vmatprep.mubr.f32.mxu0 0.0
        %812 = vmatmul.mubr.f32.gmra.mxu0 %v730
        %v813 = vpop.f32.mrf.mxu0
        %v814 = vadd.f32 0.0, %v813
        %v815 = vpop.f32.mrf.mxu0
        %816 = vmatprep.mubr.f32.mxu0 0.0
        %817 = vmatmul.mubr.f32.gmra.mxu0 %v733
        %v818 = vpop.f32.mrf.mxu0
        %v819 = vadd.f32 0.0, %v818
        %v820 = vpop.f32.mrf.mxu0
        %821 = vdwg.mxu0
        %v822 = vadd.f32 %v712, %v804
        %v823 = vadd.f32 %v713, %v809
        %v824 = vadd.f32 %v714, %v814
        %v825 = vadd.f32 %v715, %v819
        %s826 = scalar_lea.vmem %s2, 160
        %v827 = vld [vmem:[%s826] sm:$0xff]
        %v828 = vld [vmem:[%s826 + $0x8] sm:$0xff]
        %v829 = vld [vmem:[%s826 + $0x10] sm:$0xff]
        %v830 = vld [vmem:[%s826 + $0x18] sm:$0xff]
        %831 = vrot.lane.b32.xlu0 %v283, 123
        %v832 = vpop.permute.xlu0 %831
        %v834 = vsel %vm296, %v827, 0
        %v837 = vsel %vm296, %v828, 0
        %v840 = vsel %vm296, %v829, 0
        %v843 = vsel %vm296, %v830, 0
        %v845 = vsel %vm309, %v832, 0
        %847 = vmatprep.subr.mxu0 0.0
        %848 = vmatpush1.msra.mxu0 0.0
        %849 = vmatprep.subr.mxu0 0.0
        %850 = vmatpush1.msra.mxu0 0.0
        %851 = vmatprep.subr.mxu0 0.0
        %852 = vmatpush1.msra.mxu0 0.0
        %853 = vmatprep.subr.mxu0 0.0
        %854 = vmatpush1.msra.mxu0 0.0
        %855 = vmatprep.subr.mxu0 0.0
        %856 = vmatpush1.msra.mxu0 0.0
        %857 = vmatprep.subr.mxu0 0.0
        %858 = vmatpush1.msra.mxu0 0.0
        %859 = vmatprep.subr.mxu0 0.0
        %860 = vmatpush1.msra.mxu0 0.0
        %861 = vmatprep.subr.mxu0 0.0
        %862 = vmatpush1.msra.mxu0 0.0
        %863 = vmatprep.subr.mxu0 0.0
        %864 = vmatpush1.msra.mxu0 0.0
        %865 = vmatprep.subr.mxu0 0.0
        %866 = vmatpush1.msra.mxu0 0.0
        %867 = vmatprep.subr.mxu0 0.0
        %868 = vmatpush1.msra.mxu0 0.0
        %869 = vmatprep.subr.mxu0 0.0
        %870 = vmatpush1.msra.mxu0 0.0
        %871 = vmatprep.subr.mxu0 0.0
        %872 = vmatpush1.msra.mxu0 0.0
        %873 = vmatprep.subr.mxu0 0.0
        %874 = vmatpush1.msra.mxu0 0.0
        %875 = vmatprep.subr.mxu0 0.0
        %876 = vmatpush1.msra.mxu0 0.0
        %877 = vmatprep.subr.mxu0 0.0
        %878 = vmatpush1.msra.mxu0 %v845
        %879 = vmatprep.subr.mxu0 0.0
        %880 = vmatpush2.msra.mxu0 0.0
        %881 = vmatprep.subr.mxu0 0.0
        %882 = vmatpush2.msra.mxu0 0.0
        %883 = vmatprep.subr.mxu0 0.0
        %884 = vmatpush2.msra.mxu0 0.0
        %885 = vmatprep.subr.mxu0 0.0
        %886 = vmatpush2.msra.mxu0 0.0
        %887 = vmatprep.subr.mxu0 0.0
        %888 = vmatpush2.msra.mxu0 0.0
        %889 = vmatprep.subr.mxu0 0.0
        %890 = vmatpush2.msra.mxu0 0.0
        %891 = vmatprep.subr.mxu0 0.0
        %892 = vmatpush2.msra.mxu0 0.0
        %893 = vmatprep.subr.mxu0 0.0
        %894 = vmatpush2.msra.mxu0 0.0
        %895 = vmatprep.subr.mxu0 0.0
        %896 = vmatpush2.msra.mxu0 0.0
        %897 = vmatprep.subr.mxu0 0.0
        %898 = vmatpush2.msra.mxu0 0.0
        %899 = vmatprep.subr.mxu0 0.0
        %900 = vmatpush2.msra.mxu0 0.0
        %901 = vmatprep.subr.mxu0 0.0
        %902 = vmatpush2.msra.mxu0 0.0
        %903 = vmatprep.subr.mxu0 0.0
        %904 = vmatpush2.msra.mxu0 0.0
        %905 = vmatprep.subr.mxu0 0.0
        %906 = vmatpush2.msra.mxu0 0.0
        %907 = vmatprep.subr.mxu0 0.0
        %908 = vmatpush2.msra.mxu0 0.0
        %909 = vmatprep.subr.mxu0 0.0
        %910 = vmatpush2.msra.mxu0 0.0
        %911 = vmatprep.mubr.f32.mxu0 0.0
        %912 = vmatmul.mubr.f32.gmra.mxu0 %v834
        %v913 = vpop.f32.mrf.mxu0
        %v914 = vadd.f32 0.0, %v913
        %v915 = vpop.f32.mrf.mxu0
        %916 = vmatprep.mubr.f32.mxu0 0.0
        %917 = vmatmul.mubr.f32.gmra.mxu0 %v837
        %v918 = vpop.f32.mrf.mxu0
        %v919 = vadd.f32 0.0, %v918
        %v920 = vpop.f32.mrf.mxu0
        %921 = vmatprep.mubr.f32.mxu0 0.0
        %922 = vmatmul.mubr.f32.gmra.mxu0 %v840
        %v923 = vpop.f32.mrf.mxu0
        %v924 = vadd.f32 0.0, %v923
        %v925 = vpop.f32.mrf.mxu0
        %926 = vmatprep.mubr.f32.mxu0 0.0
        %927 = vmatmul.mubr.f32.gmra.mxu0 %v843
        %v928 = vpop.f32.mrf.mxu0
        %v929 = vadd.f32 0.0, %v928
        %v930 = vpop.f32.mrf.mxu0
        %931 = vdwg.mxu0
        %v932 = vadd.f32 %v822, %v914
        %v933 = vadd.f32 %v823, %v919
        %v934 = vadd.f32 %v824, %v924
        %v935 = vadd.f32 %v825, %v929
        %v936 = vld [vmem:[%s3] sm:$0xff]
        %v937 = vld [vmem:[%s3 + $0x8] sm:$0xff]
        %v938 = vld [vmem:[%s3 + $0x10] sm:$0xff]
        %v939 = vld [vmem:[%s3 + $0x18] sm:$0xff]
        %941 = vset.pattern.permute.xlu0 0
        %942 = vperm.xlu0 %941, %v936
        %v943 = vpop.permute.xlu0 %942
        %946 = vset.pattern.permute.xlu0 0
        %947 = vperm.xlu0 %946, %v937
        %v948 = vpop.permute.xlu0 %947
        %951 = vset.pattern.permute.xlu0 0
        %952 = vperm.xlu0 %951, %v938
        %v953 = vpop.permute.xlu0 %952
        %956 = vset.pattern.permute.xlu0 0
        %957 = vperm.xlu0 %956, %v939
        %v958 = vpop.permute.xlu0 %957
        %v960 = vadd.f32 %v932, %v943
        %v961 = vadd.f32 %v933, %v948
        %v962 = vadd.f32 %v934, %v953
        %v963 = vadd.f32 %v935, %v958
        %v964 = vxor.u32 %v960, 2147483648
        %v965 = vxor.u32 %v961, 2147483648
        %v966 = vmul.f32 %v964, 1.442695
        %v967 = vpow.pop %v966
        %v968 = vmul.f32 %v965, 1.442695
        %v969 = vpow.pop %v968
        %v970 = vadd.f32 %v967, 1.0
        %v971 = vadd.f32 %v969, 1.0
        %v972 = vrcp.pop %v970
        %v973 = vmul.f32 1.0, %v972
        %v974 = vrcp.pop %v971
        %v975 = vmul.f32 1.0, %v974
        %v976 = vtanh.pop %v962
        %v977 = vtanh.pop %v963
        %v978 = vmul.f32 %v973, %v976
        %v979 = vmul.f32 %v975, %v977
        %vm980 = vcmask 130048
        %981 = vst.msk [vmem:[%s246] sm:$0xff] %vm980, %v978
        %982 = vst.msk [vmem:[%s246 + $0x8] sm:$0xff] %vm980, %v979
        %s983 = sand.u32 %s144, 1
        %s984 = scalar_lea.sflag [#allocation3], %s983
        %s985 = sand.u32 %s144, 1
        %s986 = smul.addr %s985, 16
        %s987 = scalar_lea.vmem [#allocation2], %s986
        // Predicated region
        $region37: #{tpu_custom_call.1} parent=35 // pred_check
          %p988 = pneg %p154
        $region38: #{tpu_custom_call.1} parent=35 // pred_check_branch
          %990 = sbr.rel (%p988) target = $region40
        $region39: #{tpu_custom_call.1} parent=35 // pred_region
          %s992 = ssub.s32 256, 256
          %993 = vsyncadd %s984, %s992
          %s994 = smul.addr %s22, 2
          %s995 = sadd.s32 %s23, %s994
          %s996 = smul.addr %s995, 128
          %s997 = scalar_lea.hbm %s4, %s996
          %s998 = sshll.u32 %s987, 4
          %s999 = int_to_ptr.vmem [resolvable:$true] %s998
          %1004 = dma.vmem_to_hbm [thread:$0]  %s999, 256, %s997, %s984, 128, 128, 8
        $region40: #{tpu_custom_call.1} parent=35 // pred_fallthru
          _
      $region36: #{tpu_custom_call.1} parent=5 // pred_fallthru
        _
      %p1005 = scmp.le.s32.totalorder 2, %s13
      // Predicated region
      $region41: #{tpu_custom_call.1} parent=5 // pred_check
        %p1006 = pneg %p1005
      $region42: #{tpu_custom_call.1} parent=5 // pred_check_branch
        %1008 = sbr.rel (%p1006) target = $region44
      $region43: #{tpu_custom_call.1} parent=5 // pred_region
        %s1009 = ssub.s32 %s13, 2
        // Predicated region
        $region45: #{tpu_custom_call.1} parent=43 // pred_check
          %p1010 = pneg %p160
        $region46: #{tpu_custom_call.1} parent=43 // pred_check_branch
          %1012 = sbr.rel (%p1010) target = $region48
        $region47: #{tpu_custom_call.1} parent=43 // pred_region
          %s1013 = sand.u32 %s145, 1
          %s1014 = scalar_lea.sflag [#allocation3], %s1013
          %s1015 = sand.u32 %s145, 1
          %s1016 = smul.addr %s1015, 16
          %s1017 = scalar_lea.vmem [#allocation2], %s1016
          %1018 = dma.done %s1014, 256
        $region48: #{tpu_custom_call.1} parent=43 // pred_fallthru
          _
      $region44: #{tpu_custom_call.1} parent=5 // pred_fallthru
        _
    $region6: #{tpu_custom_call.1} parent=1 // loop_footer
      %s17 = sadd.s32 1, %s13
    $region7: #{tpu_custom_call.1} parent=1 // loop_footer_branch
      %12 = sbr.rel target = $region3
    $region8: #{tpu_custom_call.1} parent=1 // loop_exit
      _
    %1019 = vsyncpa [#allocation3], 1
    %s1020 = scalar_lea.sflag [#allocation3], 1
    %1021 = vsyncpa %s1020, 1

</llo_original>
